<compile_context>
chip_gen: v5e
topology: v5e:2x2
jax: 0.10.0
libtpu: 0.0.40
codegen_flags: <defaults>
</compile_context>

<pallas_src>
import functools

import jax
import jax.numpy as jnp
from jax.experimental import pallas as pl
from jax.experimental.pallas import tpu as pltpu

_EPS = 1e-5
_VMEM_LIMIT = 32 * 1024 * 1024          # explicit scoped-VMEM limit (all gens)
_TILE_BUDGET = 12 * 1024 * 1024         # budget for double-buffered tiles
_FUSED_BYTES = 2 * 1024 * 1024          # X (as f32) threshold for fused path
_FUSED_MAX_N = 64                       # keep the static per-batch loop short


def _pick_l_tile(length, c_in, c_out, itemsize, *, cap=2048,
                 budget_bytes=_TILE_BUDGET):
    """Largest L tile fitting the VMEM budget (128-multiple unless L is small).

    Budget counts the dominant pass-2 footprint: double-buffered x tile +
    double-buffered output tile per column (BN math is in-register f32).
    """
    per_col = 2 * (c_in + c_out) * max(int(itemsize), 4)
    fit = max(budget_bytes // per_col, 128)
    if length <= min(cap, fit):
        return int(length)                       # single tile per row, any L
    tl = min(cap, fit, length)
    return max(128, (tl // 128) * 128)           # tail handled by cdiv + mask


# --------------------------- tiled two-pass path ---------------------------


def _stats_kernel(x_ref, sum_ref, sq_ref, *, tl, aw, length, needs_mask):
    """Lane-dense per-batch partial sums over the L axis.

    x_ref: (1, C, TL).  sum_ref/sq_ref: (1, C, AW) resident per-batch
    accumulators (AW = 128 when TL is a 128-multiple, else AW = TL).
    Only VPU adds in the hot loop; the AW->1 and over-N reductions happen in
    XLA on tiny arrays after the call.
    """
    j = pl.program_id(1)

    @pl.when(j == 0)
    def _():
        sum_ref[...] = jnp.zeros_like(sum_ref)
        sq_ref[...] = jnp.zeros_like(sq_ref)

    x = x_ref[0].astype(jnp.float32)                        # (C, TL)
    if needs_mask:
        # Last L tile may extend past the array edge; zero the padding columns.
        col = jax.lax.broadcasted_iota(jnp.int32, x.shape, 1)
        x = jnp.where(j * tl + col < length, x, 0.0)

    s = x[:, 0:aw]
    sq = s * s
    for q in range(1, tl // aw):                            # static, unrolled
        xc = x[:, q * aw:(q + 1) * aw]
        s = s + xc
        sq = sq + xc * xc
    sum_ref[0] += s
    sq_ref[0] += sq


def _apply_conv_kernel(x_ref, a_ref, b_ref, w_ref, o_ref):
    """Fused (x*a+b), ReLU, 1x1 conv on one (1, C_in, TL) tile.

    a/b: (C_in, 1) folded BN scale/shift, w: (C_out, C_in), o: (1, C_out, TL).
    MXU operands use w's dtype (bf16 when mxu_bf16), accumulation in f32.
    """
    x = x_ref[0].astype(jnp.float32)                        # (C_in, TL)
    y = jnp.maximum(x * a_ref[...] + b_ref[...], 0.0)       # BN + ReLU (f32)
    w = w_ref[...]
    o_ref[0] = jnp.dot(w, y.astype(w.dtype),
                       preferred_element_type=jnp.float32).astype(o_ref.dtype)


def _apply_kernel(x_ref, a_ref, b_ref, o_ref):
    """disable_conv=True branch: BN + ReLU only."""
    x = x_ref[0].astype(jnp.float32)
    o_ref[0] = jnp.maximum(x * a_ref[...] + b_ref[...], 0.0).astype(o_ref.dtype)


# ------------------------- fused single-call path --------------------------


def _fused_conv_kernel(x_ref, g_ref, bt_ref, w_ref, o_ref, *, count):
    """X-resident BN (mean + centered var) + ReLU + 1x1 conv in one call."""
    x = x_ref[...].astype(jnp.float32)                      # (N, C, L)
    mean = jnp.sum(jnp.sum(x, axis=0), axis=-1, keepdims=True) / count  # (C,1)
    xc = x - mean
    var = jnp.sum(jnp.sum(xc * xc, axis=0), axis=-1, keepdims=True) / count
    a = g_ref[...].astype(jnp.float32) * jax.lax.rsqrt(var + _EPS)      # (C,1)
    b = bt_ref[...].astype(jnp.float32) - mean * a                      # (C,1)
    w = w_ref[...]
    for i in range(x.shape[0]):                              # static small N
        yi = jnp.maximum(x[i] * a + b, 0.0)                  # (C, L)
        o_ref[i] = jnp.dot(w, yi.astype(w.dtype),
                           preferred_element_type=jnp.float32).astype(o_ref.dtype)


def _fused_kernel(x_ref, g_ref, bt_ref, o_ref, *, count):
    """X-resident BN + ReLU (disable_conv=True) in one call."""
    x = x_ref[...].astype(jnp.float32)                      # (N, C, L)
    mean = jnp.sum(jnp.sum(x, axis=0), axis=-1, keepdims=True) / count
    xc = x - mean
    var = jnp.sum(jnp.sum(xc * xc, axis=0), axis=-1, keepdims=True) / count
    a = g_ref[...].astype(jnp.float32) * jax.lax.rsqrt(var + _EPS)
    b = bt_ref[...].astype(jnp.float32) - mean * a
    o_ref[...] = jnp.maximum(x * a + b, 0.0).astype(o_ref.dtype)


# --------------------------------- wrapper ---------------------------------


@functools.partial(
    jax.jit,
    static_argnames=("disable_conv", "mxu_bf16", "force_two_pass", "l_tile_cap"))
def bottleneck_block(x_ncl, gamma, beta, conv_w=None, *, disable_conv=False,
                     mxu_bf16=True, force_two_pass=False, l_tile_cap=2048):
    """Forward pass of BottleneckBlock (training-mode BatchNorm1d).

    Args:
      x_ncl:   (N, C_in, L)  -- PyTorch NCL layout, kept end-to-end.
      gamma:   (C_in,)       BatchNorm1d weight.
      beta:    (C_in,)       BatchNorm1d bias.
      conv_w:  (C_out, C_in, 1) or (C_out, C_in) 1x1 Conv1d weight (no bias).
               Ignored when disable_conv=True.
      mxu_bf16: cast f32 conv operands to bf16 for the MXU (f32 accumulation).
      force_two_pass / l_tile_cap: testing / tuning knobs.
    Returns:
      (N, C_out, L) if conv enabled, else (N, C_in, L).
    """
    n, c_in, length = x_ncl.shape
    x_itemsize = int(x_ncl.dtype.itemsize)

    if disable_conv:
        c_out, w = c_in, None
    else:
        c_out = conv_w.shape[0]
        w = conv_w.reshape(c_out, c_in)          # squeeze kernel_size=1 dim
        if mxu_bf16 and w.dtype == jnp.float32:
            w = w.astype(jnp.bfloat16)           # bf16 MXU path (f32 accum)

    # ---- Fused path: X resident in VMEM -> 1 HBM read + 1 write total. ----
    small = ((not force_two_pass) and n <= _FUSED_MAX_N
             and n * c_in * length * 4 <= _FUSED_BYTES)
    if small:
        g2 = gamma.reshape(c_in, 1)
        bt2 = beta.reshape(c_in, 1)
        cp = pltpu.CompilerParams(vmem_limit_bytes=_VMEM_LIMIT)
        if disable_conv:
            return pl.pallas_call(
                functools.partial(_fused_kernel, count=float(n * length)),
                out_shape=jax.ShapeDtypeStruct((n, c_in, length), x_ncl.dtype),
                compiler_params=cp,
            )(x_ncl, g2, bt2)
        return pl.pallas_call(
            functools.partial(_fused_conv_kernel, count=float(n * length)),
            out_shape=jax.ShapeDtypeStruct((n, c_out, length), x_ncl.dtype),
            compiler_params=cp,
        )(x_ncl, g2, bt2, w)

    # ------------------------- Tiled two-pass path -------------------------
    tl = _pick_l_tile(length, c_in, c_out, x_itemsize, cap=l_tile_cap)
    aw = 128 if tl % 128 == 0 else tl            # lane-dense accumulator width
    n_l = pl.cdiv(length, tl)
    grid = (n, n_l)
    needs_mask = (length % tl) != 0

    x_spec = pl.BlockSpec((1, c_in, tl), lambda i, j: (i, 0, j))
    stat_spec = pl.BlockSpec((1, c_in, aw), lambda i, j: (i, 0, 0))

    # Pass 1: per-batch, lane-dense partial sums.  Batch axis "parallel"
    # (megacore on v7x), L axis "arbitrary" (accumulation).
    part_sum, part_sq = pl.pallas_call(
        functools.partial(_stats_kernel, tl=tl, aw=aw, length=length,
                          needs_mask=needs_mask),
        out_shape=(jax.ShapeDtypeStruct((n, c_in, aw), jnp.float32),
                   jax.ShapeDtypeStruct((n, c_in, aw), jnp.float32)),
        grid=grid,
        in_specs=[x_spec],
        out_specs=(stat_spec, stat_spec),
        compiler_params=pltpu.CompilerParams(
            dimension_semantics=("parallel", "arbitrary"),
            vmem_limit_bytes=_VMEM_LIMIT),
        cost_estimate=pl.CostEstimate(
            flops=int(3 * n * c_in * length),
            transcendentals=0,
            bytes_accessed=int(n * c_in * length * x_itemsize
                               + 2 * n * c_in * aw * 4)),
    )(x_ncl)

    # Fold BN into per-channel scale/shift on tiny arrays (XLA, done once).
    count = float(n * length)
    x_sum = jnp.sum(part_sum, axis=(0, 2))                  # (C,)
    x_sq = jnp.sum(part_sq, axis=(0, 2))                    # (C,)
    mean = x_sum / count
    var = jnp.maximum(x_sq / count - mean * mean, 0.0)      # biased, clamped
    a = gamma.astype(jnp.float32) * jax.lax.rsqrt(var + _EPS)
    b = beta.astype(jnp.float32) - mean * a
    a2 = a.reshape(c_in, 1)
    b2 = b.reshape(c_in, 1)

    ab_spec = pl.BlockSpec((c_in, 1), lambda i, j: (0, 0))

    # Pass 2: fused normalize + ReLU (+ 1x1 conv), fully parallel grid.
    if disable_conv:
        return pl.pallas_call(
            _apply_kernel,
            out_shape=jax.ShapeDtypeStruct((n, c_in, length), x_ncl.dtype),
            grid=grid,
            in_specs=[x_spec, ab_spec, ab_spec],
            out_specs=pl.BlockSpec((1, c_in, tl), lambda i, j: (i, 0, j)),
            compiler_params=pltpu.CompilerParams(
                dimension_semantics=("parallel", "parallel"),
                vmem_limit_bytes=_VMEM_LIMIT),
            cost_estimate=pl.CostEstimate(
                flops=int(3 * n * c_in * length),
                transcendentals=0,
                bytes_accessed=int(2 * n * c_in * length * x_itemsize)),
        )(x_ncl, a2, b2)

    return pl.pallas_call(
        _apply_conv_kernel,
        out_shape=jax.ShapeDtypeStruct((n, c_out, length), x_ncl.dtype),
        grid=grid,
        in_specs=[x_spec, ab_spec, ab_spec,
                  pl.BlockSpec((c_out, c_in), lambda i, j: (0, 0))],
        out_specs=pl.BlockSpec((1, c_out, tl), lambda i, j: (i, 0, j)),
        compiler_params=pltpu.CompilerParams(
            dimension_semantics=("parallel", "parallel"),
            vmem_limit_bytes=_VMEM_LIMIT),
        cost_estimate=pl.CostEstimate(
            flops=int(2 * n * length * c_in * c_out),
            transcendentals=0,
            bytes_accessed=int(n * length * (c_in + c_out) * x_itemsize
                               + c_out * c_in * int(w.dtype.itemsize))),
    )(x_ncl, a2, b2, w)


def _reference(x_ncl, gamma, beta, conv_w, disable_conv):
    """Plain-JAX reference mirroring PyTorch training-mode forward."""
    mean = jnp.mean(x_ncl, axis=(0, 2), keepdims=True)
    var = jnp.mean((x_ncl - mean) ** 2, axis=(0, 2), keepdims=True)
    y = (x_ncl - mean) / jnp.sqrt(var + _EPS)
    y = y * gamma.reshape(1, -1, 1) + beta.reshape(1, -1, 1)
    y = jnp.maximum(y, 0.0)
    if disable_conv:
        return y
    w = conv_w.reshape(conv_w.shape[0], x_ncl.shape[1])
    return jnp.einsum("oc,ncl->nol", w, y)


if __name__ == "__main__":
    key = jax.random.PRNGKey(0)
    k_x, k_w, k_g, k_b = jax.random.split(key, 4)

    # Small shapes consistent with the module: batch=2, in_planes=4, seq=16.
    N, C_IN, L, C_OUT = 2, 4, 16, 8
    x = jax.random.normal(k_x, (N, C_IN, L), dtype=jnp.float32)
    gamma = 1.0 + 0.1 * jax.random.normal(k_g, (C_IN,), dtype=jnp.float32)
    beta = 0.1 * jax.random.normal(k_b, (C_IN,), dtype=jnp.float32)
    conv_w = jax.random.normal(k_w, (C_OUT, C_IN, 1), dtype=jnp.float32) * 0.1

    ref_conv = _reference(x, gamma, beta, conv_w, disable_conv=False)
    ref_bn = _reference(x, gamma, beta, conv_w, disable_conv=True)

    # (a) fused single-call path, f32 MXU operands (tight tolerance).
    out = bottleneck_block(x, gamma, beta, conv_w, mxu_bf16=False)
    jax.block_until_ready(out)
    assert out.shape == (N, C_OUT, L)
    assert jnp.allclose(out, ref_conv, atol=1e-4, rtol=1e-4)

    # (b) fused path, BN + ReLU only.
    out = bottleneck_block(x, gamma, beta, conv_w, disable_conv=True)
    jax.block_until_ready(out)
    assert out.shape == (N, C_IN, L)
    assert jnp.allclose(out, ref_bn, atol=1e-4, rtol=1e-4)

    # (c) tiled two-pass path with default bf16 MXU operands (looser tol).
    out = bottleneck_block(x, gamma, beta, conv_w, force_two_pass=True)
    jax.block_until_ready(out)
    assert out.shape == (N, C_OUT, L)
    assert jnp.allclose(out, ref_conv, atol=5e-2, rtol=5e-2)

    # (d) tiled two-pass path, BN + ReLU only (tight tolerance).
    out = bottleneck_block(x, gamma, beta, conv_w, disable_conv=True,
                           force_two_pass=True)
    jax.block_until_ready(out)
    assert jnp.allclose(out, ref_bn, atol=1e-4, rtol=1e-4)

    # (e) tiled path exercising cdiv + tail masking (L not a tile multiple).
    L2 = 300
    x2 = jax.random.normal(k_x, (N, C_IN, L2), dtype=jnp.float32)
    out = bottleneck_block(x2, gamma, beta, conv_w, mxu_bf16=False,
                           force_two_pass=True, l_tile_cap=128)
    jax.block_until_ready(out)
    ref2 = _reference(x2, gamma, beta, conv_w, disable_conv=False)
    assert out.shape == (N, C_OUT, L2)
    assert jnp.allclose(out, ref2, atol=1e-4, rtol=1e-4)

    print("KERNEL_OK")
</pallas_src>

<mosaic_0001>
module attributes {stable_mosaic.version = 11 : i64} {
  func.func @_fused_conv_kernel(%arg0: memref<2x4x16xf32, #tpu.memory_space<vmem>>, %arg1: memref<4x1xf32, #tpu.memory_space<vmem>>, %arg2: memref<4x1xf32, #tpu.memory_space<vmem>>, %arg3: memref<8x4xf32, #tpu.memory_space<vmem>>, %arg4: memref<2x8x16xf32, #tpu.memory_space<vmem>>) attributes {dimension_semantics = [], scalar_prefetch = 0 : i64, scratch_operands = 0 : i64, tpu.core_type = #tpu.core_type<tc>} {
    %c0 = arith.constant 0 : index
    %c0_0 = arith.constant 0 : index
    %c0_1 = arith.constant 0 : index
    %0 = vector.load %arg0[%c0, %c0_0, %c0_1] : memref<2x4x16xf32, #tpu.memory_space<vmem>>, vector<2x4x16xf32>
    %cst = arith.constant dense<0.000000e+00> : vector<4x16xf32>
    %1 = vector.multi_reduction <add>, %0, %cst [0] : vector<2x4x16xf32> to vector<4x16xf32>
    %cst_2 = arith.constant dense<0.000000e+00> : vector<4xf32>
    %2 = vector.multi_reduction <add>, %1, %cst_2 [1] : vector<4x16xf32> to vector<4xf32>
    %3 = vector.shape_cast %2 : vector<4xf32> to vector<4x1xf32>
    %cst_3 = arith.constant 3.200000e+01 : f32
    %4 = vector.broadcast %cst_3 : f32 to vector<4x1xf32>
    %5 = arith.divf %3, %4 : vector<4x1xf32>
    %6 = vector.shape_cast %5 : vector<4x1xf32> to vector<1x4x1xf32>
    %7 = vector.broadcast %6 : vector<1x4x1xf32> to vector<2x4x16xf32>
    %8 = arith.subf %0, %7 : vector<2x4x16xf32>
    %9 = arith.mulf %8, %8 : vector<2x4x16xf32>
    %cst_4 = arith.constant dense<0.000000e+00> : vector<4x16xf32>
    %10 = vector.multi_reduction <add>, %9, %cst_4 [0] : vector<2x4x16xf32> to vector<4x16xf32>
    %cst_5 = arith.constant dense<0.000000e+00> : vector<4xf32>
    %11 = vector.multi_reduction <add>, %10, %cst_5 [1] : vector<4x16xf32> to vector<4xf32>
    %12 = vector.shape_cast %11 : vector<4xf32> to vector<4x1xf32>
    %cst_6 = arith.constant 3.200000e+01 : f32
    %13 = vector.broadcast %cst_6 : f32 to vector<4x1xf32>
    %14 = arith.divf %12, %13 : vector<4x1xf32>
    %c0_7 = arith.constant 0 : index
    %c0_8 = arith.constant 0 : index
    %15 = vector.load %arg1[%c0_7, %c0_8] : memref<4x1xf32, #tpu.memory_space<vmem>>, vector<4x1xf32>
    %cst_9 = arith.constant 9.99999974E-6 : f32
    %16 = vector.broadcast %cst_9 : f32 to vector<4x1xf32>
    %17 = arith.addf %14, %16 : vector<4x1xf32>
    %18 = math.rsqrt %17 : vector<4x1xf32>
    %19 = arith.mulf %15, %18 : vector<4x1xf32>
    %c0_10 = arith.constant 0 : index
    %c0_11 = arith.constant 0 : index
    %20 = vector.load %arg2[%c0_10, %c0_11] : memref<4x1xf32, #tpu.memory_space<vmem>>, vector<4x1xf32>
    %21 = arith.mulf %5, %19 : vector<4x1xf32>
    %22 = arith.subf %20, %21 : vector<4x1xf32>
    %c0_12 = arith.constant 0 : index
    %c0_13 = arith.constant 0 : index
    %23 = vector.load %arg3[%c0_12, %c0_13] : memref<8x4xf32, #tpu.memory_space<vmem>>, vector<8x4xf32>
    %24 = vector.extract_strided_slice %0 {offsets = [0, 0, 0], sizes = [1, 4, 16], strides = [1, 1, 1]} : vector<2x4x16xf32> to vector<1x4x16xf32>
    %25 = vector.shape_cast %24 : vector<1x4x16xf32> to vector<4x16xf32>
    %26 = vector.broadcast %19 : vector<4x1xf32> to vector<4x16xf32>
    %27 = arith.mulf %25, %26 : vector<4x16xf32>
    %28 = vector.broadcast %22 : vector<4x1xf32> to vector<4x16xf32>
    %29 = arith.addf %27, %28 : vector<4x16xf32>
    %cst_14 = arith.constant 0.000000e+00 : f32
    %30 = vector.broadcast %cst_14 : f32 to vector<4x16xf32>
    %31 = arith.maximumf %29, %30 : vector<4x16xf32>
    %cst_15 = arith.constant dense<0.000000e+00> : vector<8x16xf32>
    %32 = tpu.matmul %23, %31, %cst_15 {dimension_numbers = #tpu.dot_dimension_numbers<[1], [0], [0], [1], [0, 0, 1, 1], [], []>} : vector<8x4xf32>, vector<4x16xf32>, vector<8x16xf32> -> vector<8x16xf32>
    %c0_16 = arith.constant 0 : index
    %c0_17 = arith.constant 0 : index
    %c0_18 = arith.constant 0 : index
    %33 = vector.load %arg4[%c0_16, %c0_17, %c0_18] : memref<2x8x16xf32, #tpu.memory_space<vmem>>, vector<1x8x16xf32>
    %34 = vector.shape_cast %33 : vector<1x8x16xf32> to vector<8x16xf32>
    %35 = vector.shape_cast %32 : vector<8x16xf32> to vector<1x8x16xf32>
    tpu.vector_store %arg4[%c0_16, %c0_17, %c0_18], %35 {strides = array<i32>} : memref<2x8x16xf32, #tpu.memory_space<vmem>>, vector<1x8x16xf32>,
    %36 = vector.extract_strided_slice %0 {offsets = [1, 0, 0], sizes = [1, 4, 16], strides = [1, 1, 1]} : vector<2x4x16xf32> to vector<1x4x16xf32>
    %37 = vector.shape_cast %36 : vector<1x4x16xf32> to vector<4x16xf32>
    %38 = vector.broadcast %19 : vector<4x1xf32> to vector<4x16xf32>
    %39 = arith.mulf %37, %38 : vector<4x16xf32>
    %40 = vector.broadcast %22 : vector<4x1xf32> to vector<4x16xf32>
    %41 = arith.addf %39, %40 : vector<4x16xf32>
    %cst_19 = arith.constant 0.000000e+00 : f32
    %42 = vector.broadcast %cst_19 : f32 to vector<4x16xf32>
    %43 = arith.maximumf %41, %42 : vector<4x16xf32>
    %cst_20 = arith.constant dense<0.000000e+00> : vector<8x16xf32>
    %44 = tpu.matmul %23, %43, %cst_20 {dimension_numbers = #tpu.dot_dimension_numbers<[1], [0], [0], [1], [0, 0, 1, 1], [], []>} : vector<8x4xf32>, vector<4x16xf32>, vector<8x16xf32> -> vector<8x16xf32>
    %c1 = arith.constant 1 : index
    %c0_21 = arith.constant 0 : index
    %c0_22 = arith.constant 0 : index
    %45 = vector.load %arg4[%c1, %c0_21, %c0_22] : memref<2x8x16xf32, #tpu.memory_space<vmem>>, vector<1x8x16xf32>
    %46 = vector.shape_cast %45 : vector<1x8x16xf32> to vector<8x16xf32>
    %47 = vector.shape_cast %44 : vector<8x16xf32> to vector<1x8x16xf32>
    tpu.vector_store %arg4[%c1, %c0_21, %c0_22], %47 {strides = array<i32>} : memref<2x8x16xf32, #tpu.memory_space<vmem>>, vector<1x8x16xf32>,
    return
  }
}

</mosaic_0001>

<llo_original>
// kernel: bottleneck_block.1
$region0: #{bottleneck_block.1}
  #allocation0 [shape = 'u32[]', space=smem, size = 0x4, offset = 0x4, fixed_abs, tag = 'smem constant byte address 0x4 - core index']
  #allocation1 [shape = 'u32[72,128]{1,0:T(1,128)}', space=vmem, size = 0x9000, scoped, tag = 'internal scratch']
  %s0 = inlined_call_operand.vmem [shape: f32[2,4,16], index: 0, kind: input, shape index: {}]
  %s1 = inlined_call_operand.vmem [shape: f32[4,1], index: 1, kind: input, shape index: {}]
  %s2 = inlined_call_operand.vmem [shape: f32[4,1], index: 2, kind: input, shape index: {}]
  %s3 = inlined_call_operand.vmem [shape: f32[8,4], index: 3, kind: input, shape index: {}]
  %s4 = inlined_call_operand.hbm [shape: f32[2,8,16], index: 4, kind: output, shape index: {}]
  %s5 = sld [smem:[#allocation0]]
  $region26: #{bottleneck_block.1} parent=0
    _
  %s7 = ssub.s32 1, %s5
  %s8 = scalar_select 0, %s7, %s5
  $region1: #{bottleneck_block.1} parent=0
    #allocation2 [shape = 'u8[8192]{0}', space=vmem, size = 0x2000, scoped, tag = 'output window, operand 0, single buffered']
    #allocation3 [shape = 's32[1]{0}', space=sflag, size = 0x4, scoped, tag = 'scoped memory for bottleneck_block.1']
    %9 = vsyncpa [#allocation3], 0
    // Predicated region
    $region2: #{bottleneck_block.1} parent=1 // pred_check
      _
    $region3: #{bottleneck_block.1} parent=1 // pred_check_branch
      %11 = sbr.rel (0) target = $region5
    $region4: #{bottleneck_block.1} parent=1 // pred_region
      _
    $region5: #{bottleneck_block.1} parent=1 // pred_fallthru
      _
    // Predicated region
    $region6: #{bottleneck_block.1} parent=1 // pred_check
      _
    $region7: #{bottleneck_block.1} parent=1 // pred_check_branch
      %13 = sbr.rel (0) target = $region9
    $region8: #{bottleneck_block.1} parent=1 // pred_region
      _
    $region9: #{bottleneck_block.1} parent=1 // pred_fallthru
      _
    // Predicated region
    $region10: #{bottleneck_block.1} parent=1 // pred_check
      _
    $region11: #{bottleneck_block.1} parent=1 // pred_check_branch
      %15 = sbr.rel (0) target = $region13
    $region12: #{bottleneck_block.1} parent=1 // pred_region
      _
    $region13: #{bottleneck_block.1} parent=1 // pred_fallthru
      _
    // Predicated region
    $region14: #{bottleneck_block.1} parent=1 // pred_check
      _
    $region15: #{bottleneck_block.1} parent=1 // pred_check_branch
      %17 = sbr.rel (0) target = $region17
    $region16: #{bottleneck_block.1} parent=1 // pred_region
      _
    $region17: #{bottleneck_block.1} parent=1 // pred_fallthru
      _
    %v18 = vld [vmem:[%s0] sm:$0xf]
    %v19 = vld [vmem:[%s0 + $0x4] sm:$0xf]
    %vm20 = vcmask 125952
    %v21 = vsel %vm20, %v18, 0.0
    %v22 = vsel %vm20, %v19, 0.0
    %v23 = vadd.f32 %v21, %v22
    %v24 = vsel %vm20, %v23, 0.0
    %25 = vadd.xlane.f32.xlu0 %v24
    %v26 = vpop.xlane.xlu0 %25
    %v27 = vrcp.pop 32.0
    %v28 = vmul.f32 32.0, %v27
    %v29 = vsub.f32 1.0, %v28
    %v30 = vmul.f32 %v27, %v29
    %v31 = vadd.f32 %v27, %v30
    %vm32 = vweird.f32 %v27
    %v33 = vsel %vm32, %v27, %v31
    %v34 = vmul.f32 %v26, %v33
    %v35 = vsub.f32 %v18, %v34
    %v36 = vsub.f32 %v19, %v34
    %v37 = vmul.f32 %v35, %v35
    %v38 = vmul.f32 %v36, %v36
    %v39 = vsel %vm20, %v37, 0.0
    %v40 = vsel %vm20, %v38, 0.0
    %v41 = vadd.f32 %v39, %v40
    %v42 = vsel %vm20, %v41, 0.0
    %43 = vadd.xlane.f32.xlu0 %v42
    %v44 = vpop.xlane.xlu0 %43
    %v45 = vmul.f32 %v44, %v33
    %v46 = vld [vmem:[%s1] sm:$0xf]
    %v47 = vadd.f32 %v45, 1e-05
    %v48 = vrsqrt.pop %v47
    %v49 = vmul.f32 %v48, %v47
    %v50 = vmul.f32 %v49, %v48
    %v51 = vmul.f32 0.5, %v50
    %v52 = vsub.f32 1.5, %v51
    %v53 = vmul.f32 %v48, %v52
    %vm54 = vweird.f32 %v47
    %vm55 = vweird.f32 %v48
    %vm56 = vmor %vm54, %vm55
    %v57 = vsel %vm56, %v48, %v53
    %v58 = vmul.f32 %v46, %v57
    %v59 = vld [vmem:[%s2] sm:$0xf]
    %v60 = vmul.f32 %v34, %v58
    %v61 = vsub.f32 %v59, %v60
    %v62 = vld [vmem:[%s3] sm:$0xff]
    %64 = vset.pattern.permute.xlu0 0
    %65 = vperm.xlu0 %64, %v58
    %v66 = vpop.permute.xlu0 %65
    %v68 = vmul.f32 %v18, %v66
    %70 = vset.pattern.permute.xlu0 0
    %71 = vperm.xlu0 %70, %v61
    %v72 = vpop.permute.xlu0 %71
    %v74 = vadd.f32 %v68, %v72
    %v75 = vmax.f32 %v74, 0.0
    %vm76 = vcmask 31744
    %v78 = vsel %vm76, %v62, 0
    %vm80 = vcmask 1043456
    %v82 = vsel %vm80, %v75, 0
    %84 = vmatpush.msra.mxu0 0.0
    %85 = vmatpush.msra.mxu0 0.0
    %86 = vmatpush.msra.mxu0 0.0
    %87 = vmatpush.msra.mxu0 0.0
    %88 = vmatpush.msra.mxu0 0.0
    %89 = vmatpush.msra.mxu0 0.0
    %90 = vmatpush.msra.mxu0 0.0
    %91 = vmatpush.msra.mxu0 0.0
    %92 = vmatpush.msra.mxu0 0.0
    %93 = vmatpush.msra.mxu0 0.0
    %94 = vmatpush.msra.mxu0 0.0
    %95 = vmatpush.msra.mxu0 0.0
    %96 = vmatpush.msra.mxu0 0.0
    %97 = vmatpush.msra.mxu0 0.0
    %98 = vmatpush.msra.mxu0 0.0
    %99 = vmatpush.msra.mxu0 %v82
    %100 = vmatmul.f32.gmra.mxu0 %v78
    %v101 = vpop.f32.mrf.mxu0
    %v102 = vadd.f32 0.0, %v101
    %103 = vdwg.mxu0
    %vm104 = vcmask 130048
    %105 = vst.msk [vmem:[#allocation2] sm:$0xff] %vm104, %v102
    %v106 = vmul.f32 %v19, %v66
    %v107 = vadd.f32 %v106, %v72
    %v108 = vmax.f32 %v107, 0.0
    %v110 = vsel %vm80, %v108, 0
    %112 = vmatpush.msra.mxu0 0.0
    %113 = vmatpush.msra.mxu0 0.0
    %114 = vmatpush.msra.mxu0 0.0
    %115 = vmatpush.msra.mxu0 0.0
    %116 = vmatpush.msra.mxu0 0.0
    %117 = vmatpush.msra.mxu0 0.0
    %118 = vmatpush.msra.mxu0 0.0
    %119 = vmatpush.msra.mxu0 0.0
    %120 = vmatpush.msra.mxu0 0.0
    %121 = vmatpush.msra.mxu0 0.0
    %122 = vmatpush.msra.mxu0 0.0
    %123 = vmatpush.msra.mxu0 0.0
    %124 = vmatpush.msra.mxu0 0.0
    %125 = vmatpush.msra.mxu0 0.0
    %126 = vmatpush.msra.mxu0 0.0
    %127 = vmatpush.msra.mxu0 %v110
    %128 = vmatmul.f32.gmra.mxu0 %v78
    %v129 = vpop.f32.mrf.mxu0
    %v130 = vadd.f32 0.0, %v129
    %131 = vdwg.mxu0
    %s132 = scalar_lea.vmem [#allocation2], 8
    %133 = vst.msk [vmem:[%s132] sm:$0xff] %vm104, %v130
    // Predicated region
    $region18: #{bottleneck_block.1} parent=1 // pred_check
      _
    $region19: #{bottleneck_block.1} parent=1 // pred_check_branch
      %135 = sbr.rel (0) target = $region21
    $region20: #{bottleneck_block.1} parent=1 // pred_region
      %137 = vsyncadd [#allocation3], 0
      %s138 = sshll.u32 [#allocation2], 4
      %s139 = int_to_ptr.vmem [resolvable:$true] %s138
      %s140 = sshll.u32 %s4, 4
      %s141 = int_to_ptr.hbm [resolvable:$true] %s140
      %146 = dma.vmem_to_hbm [thread:$0]  %s139, 256, %s141, [#allocation3], 128, 128, 8
    $region21: #{bottleneck_block.1} parent=1 // pred_fallthru
      _
    // Predicated region
    $region22: #{bottleneck_block.1} parent=1 // pred_check
      _
    $region23: #{bottleneck_block.1} parent=1 // pred_check_branch
      %148 = sbr.rel (0) target = $region25
    $region24: #{bottleneck_block.1} parent=1 // pred_region
      %150 = dma.done [#allocation3], 256
    $region25: #{bottleneck_block.1} parent=1 // pred_fallthru
      _
    %151 = vsyncpa [#allocation3], 1

</llo_original>
